<compile_context>
chip_gen: v6e
topology: v6e:2x2x1
jax: 0.10.0
libtpu: 0.0.40
codegen_flags: <defaults>
</compile_context>

<pallas_src>
import math
import numpy as np

import jax
import jax.numpy as jnp
from jax.experimental import pallas as pl
from jax.experimental.pallas import tpu as pltpu

# ----------------------------- config ---------------------------------------
VOCAB_SIZE = 128          # lane-dense inner dim for the one-hot gather matmul
HIDDEN_SIZE = 32
POSITION_BUCKET_SIZE = 8  # relative table has 2*P-1 = 15 rows
LAYER_NORM_EPS = 1e-7
SEQ_LEN = 16
BATCH = 2


# ----------------------------- fused Pallas kernel ---------------------------
def _embedding_kernel(ids_ref, table_ref, relpack_ref, we_ref, rel_out_ref):
    """Single-invocation kernel (grid=()); everything lives in VMEM.

    ids_ref     : (S*B, 1)     int32  token ids (seq-major flatten)
    table_ref   : (V, H)       f32    word embedding table
    relpack_ref : (2P-1+2, H)  f32    [relative table ; LN gamma ; LN beta]
    we_ref      : (S*B, H)     f32    out: LayerNorm'd word embeddings
    rel_out_ref : (2P-1, H)    f32    out: LayerNorm'd relative embeddings
    """
    sb = ids_ref.shape[0]
    v = table_ref.shape[0]
    r = rel_out_ref.shape[0]

    # ---- word-embedding gather as one-hot @ table on the MXU ----------------
    ids = ids_ref[...]                                              # (SB, 1) int32
    lane_iota = jax.lax.broadcasted_iota(jnp.int32, (sb, v), 1)     # (SB, V)
    onehot = (ids == lane_iota).astype(jnp.float32)                 # exact 0/1 selector
    we = jnp.dot(onehot, table_ref[...],
                 preferred_element_type=jnp.float32)                # (SB, H)

    # ---- word LayerNorm (elementwise_affine=False), f32 stats ----------------
    mean = jnp.mean(we, axis=-1, keepdims=True)
    xc = we - mean
    var = jnp.mean(xc * xc, axis=-1, keepdims=True)
    we_ref[...] = xc * jax.lax.rsqrt(var + LAYER_NORM_EPS)
    # dropout == identity (eval mode)

    # ---- relative LayerNorm (affine) — split packed operand (static slices) --
    rel = relpack_ref[0:r, :]                                       # (2P-1, H)
    gamma = relpack_ref[r:r + 1, :]                                 # (1, H)
    beta = relpack_ref[r + 1:r + 2, :]                              # (1, H)
    rm = jnp.mean(rel, axis=-1, keepdims=True)
    rc = rel - rm
    rv = jnp.mean(rc * rc, axis=-1, keepdims=True)
    rel_out_ref[...] = (rc * jax.lax.rsqrt(rv + LAYER_NORM_EPS)) * gamma + beta


def embedding_forward(input_ids, word_emb, rel_emb, rel_ln_w, rel_ln_b):
    """Returns (word_embedding (S,B,H), relative_embeddings (2P-1,H))."""
    S, B = input_ids.shape
    V, H = word_emb.shape
    R = rel_emb.shape[0]

    ids2 = input_ids.reshape(S * B, 1).astype(jnp.int32)            # host glue, free
    # Pack the input-independent relative-LN operands into one block:
    # one DMA + one padded VMEM tile instead of three.
    rel_pack = jnp.concatenate(
        [rel_emb.astype(jnp.float32),
         rel_ln_w.reshape(1, H).astype(jnp.float32),
         rel_ln_b.reshape(1, H).astype(jnp.float32)], axis=0)       # (R+2, H)

    vmem = pl.BlockSpec(memory_space=pltpu.MemorySpace.VMEM)

    we_flat, rel_out = pl.pallas_call(
        _embedding_kernel,
        out_shape=(jax.ShapeDtypeStruct((S * B, H), jnp.float32),
                   jax.ShapeDtypeStruct((R, H), jnp.float32)),
        in_specs=[vmem, vmem, vmem],
        out_specs=(vmem, vmem),
    )(ids2, word_emb.astype(jnp.float32), rel_pack)

    return we_flat.reshape(S, B, H), rel_out


# ----------------------------- main ------------------------------------------
if __name__ == "__main__":
    key = jax.random.PRNGKey(0)
    k_word, k_rel, k_ids = jax.random.split(key, 3)

    std = math.sqrt(2.0 / (5.0 * HIDDEN_SIZE))
    word_emb = std * jax.random.truncated_normal(
        k_word, -2.0, 2.0, (VOCAB_SIZE, HIDDEN_SIZE), dtype=jnp.float32)
    rel_emb = std * jax.random.truncated_normal(
        k_rel, -2.0, 2.0, (2 * POSITION_BUCKET_SIZE - 1, HIDDEN_SIZE), dtype=jnp.float32)
    rel_ln_w = jnp.ones((HIDDEN_SIZE,), jnp.float32)   # nn.LayerNorm default affine init
    rel_ln_b = jnp.zeros((HIDDEN_SIZE,), jnp.float32)

    # input_ids seq-major (S, B), matching the encoder that consumes this module
    input_ids = jax.random.randint(k_ids, (SEQ_LEN, BATCH), 0, VOCAB_SIZE, dtype=jnp.int32)

    fwd = jax.jit(embedding_forward)
    we, rel = fwd(input_ids, word_emb, rel_emb, rel_ln_w, rel_ln_b)
    jax.block_until_ready((we, rel))

    # ---- plain-JAX reference for a sanity check ----
    def _ln(x, g=None, b=None):
        m = jnp.mean(x, axis=-1, keepdims=True)
        v = jnp.mean((x - m) ** 2, axis=-1, keepdims=True)
        y = (x - m) * jax.lax.rsqrt(v + LAYER_NORM_EPS)
        if g is not None:
            y = y * g + b
        return y

    we_ref = _ln(jnp.take(word_emb, input_ids, axis=0))
    rel_ref = _ln(rel_emb, rel_ln_w, rel_ln_b)

    assert we.shape == (SEQ_LEN, BATCH, HIDDEN_SIZE)
    assert rel.shape == (2 * POSITION_BUCKET_SIZE - 1, HIDDEN_SIZE)
    assert np.all(np.isfinite(np.asarray(we))) and np.all(np.isfinite(np.asarray(rel)))
    # Tight tolerance: a wrong row selection gives O(1) post-LN errors; 1e-4 covers
    # the MXU f32 (multi-pass bf16) rounding while still catching selection bugs.
    assert np.allclose(np.asarray(we), np.asarray(we_ref), atol=1e-4, rtol=0)
    assert np.allclose(np.asarray(rel), np.asarray(rel_ref), atol=1e-5, rtol=0)
    print("KERNEL_OK")
</pallas_src>

<mosaic_0001>
module attributes {stable_mosaic.version = 11 : i64} {
  func.func @_embedding_kernel(%arg0: memref<32x1xi32, #tpu.memory_space<vmem>>, %arg1: memref<128x32xf32, #tpu.memory_space<vmem>>, %arg2: memref<17x32xf32, #tpu.memory_space<vmem>>, %arg3: memref<32x32xf32, #tpu.memory_space<vmem>>, %arg4: memref<15x32xf32, #tpu.memory_space<vmem>>) attributes {dimension_semantics = [], scalar_prefetch = 0 : i64, scratch_operands = 0 : i64, tpu.core_type = #tpu.core_type<tc>} {
    %c0 = arith.constant 0 : index
    %c0_0 = arith.constant 0 : index
    %0 = vector.load %arg0[%c0, %c0_0] : memref<32x1xi32, #tpu.memory_space<vmem>>, vector<32x1xi32>
    %1 = tpu.iota {dimensions = array<i32: 1>} : vector<32x128xi32>
    %2 = vector.broadcast %0 : vector<32x1xi32> to vector<32x128xi32>
    %3 = arith.cmpi eq, %2, %1 : vector<32x128xi32>
    %4 = arith.extui %3 : vector<32x128xi1> to vector<32x128xi32>
    %5 = arith.sitofp %4 : vector<32x128xi32> to vector<32x128xf32>
    %c0_1 = arith.constant 0 : index
    %c0_2 = arith.constant 0 : index
    %6 = vector.load %arg1[%c0_1, %c0_2] : memref<128x32xf32, #tpu.memory_space<vmem>>, vector<128x32xf32>
    %cst = arith.constant dense<0.000000e+00> : vector<32x32xf32>
    %7 = tpu.matmul %5, %6, %cst {dimension_numbers = #tpu.dot_dimension_numbers<[1], [0], [0], [1], [0, 0, 1, 1], [], []>} : vector<32x128xf32>, vector<128x32xf32>, vector<32x32xf32> -> vector<32x32xf32>
    %cst_3 = arith.constant dense<0.000000e+00> : vector<32xf32>
    %8 = vector.multi_reduction <add>, %7, %cst_3 [1] : vector<32x32xf32> to vector<32xf32>
    %9 = vector.shape_cast %8 : vector<32xf32> to vector<32x1xf32>
    %cst_4 = arith.constant 3.200000e+01 : f32
    %10 = vector.broadcast %cst_4 : f32 to vector<32x1xf32>
    %11 = arith.divf %9, %10 : vector<32x1xf32>
    %12 = vector.broadcast %11 : vector<32x1xf32> to vector<32x32xf32>
    %13 = arith.subf %7, %12 : vector<32x32xf32>
    %14 = arith.mulf %13, %13 : vector<32x32xf32>
    %cst_5 = arith.constant dense<0.000000e+00> : vector<32xf32>
    %15 = vector.multi_reduction <add>, %14, %cst_5 [1] : vector<32x32xf32> to vector<32xf32>
    %16 = vector.shape_cast %15 : vector<32xf32> to vector<32x1xf32>
    %cst_6 = arith.constant 3.200000e+01 : f32
    %17 = vector.broadcast %cst_6 : f32 to vector<32x1xf32>
    %18 = arith.divf %16, %17 : vector<32x1xf32>
    %cst_7 = arith.constant 1.000000e-07 : f32
    %19 = vector.broadcast %cst_7 : f32 to vector<32x1xf32>
    %20 = arith.addf %18, %19 : vector<32x1xf32>
    %21 = math.rsqrt %20 : vector<32x1xf32>
    %22 = vector.broadcast %21 : vector<32x1xf32> to vector<32x32xf32>
    %23 = arith.mulf %13, %22 : vector<32x32xf32>
    %c0_8 = arith.constant 0 : index
    %c0_9 = arith.constant 0 : index
    %24 = vector.load %arg3[%c0_8, %c0_9] : memref<32x32xf32, #tpu.memory_space<vmem>>, vector<32x32xf32>
    tpu.vector_store %arg3[%c0_8, %c0_9], %23 {strides = array<i32>} : memref<32x32xf32, #tpu.memory_space<vmem>>, vector<32x32xf32>,
    %c0_10 = arith.constant 0 : index
    %c0_11 = arith.constant 0 : index
    %25 = vector.load %arg2[%c0_10, %c0_11] : memref<17x32xf32, #tpu.memory_space<vmem>>, vector<15x32xf32>
    %c15 = arith.constant 15 : index
    %c0_12 = arith.constant 0 : index
    %26 = vector.load %arg2[%c15, %c0_12] : memref<17x32xf32, #tpu.memory_space<vmem>>, vector<1x32xf32>
    %c16 = arith.constant 16 : index
    %c0_13 = arith.constant 0 : index
    %27 = vector.load %arg2[%c16, %c0_13] : memref<17x32xf32, #tpu.memory_space<vmem>>, vector<1x32xf32>
    %cst_14 = arith.constant dense<0.000000e+00> : vector<15xf32>
    %28 = vector.multi_reduction <add>, %25, %cst_14 [1] : vector<15x32xf32> to vector<15xf32>
    %29 = vector.shape_cast %28 : vector<15xf32> to vector<15x1xf32>
    %cst_15 = arith.constant 3.200000e+01 : f32
    %30 = vector.broadcast %cst_15 : f32 to vector<15x1xf32>
    %31 = arith.divf %29, %30 : vector<15x1xf32>
    %32 = vector.broadcast %31 : vector<15x1xf32> to vector<15x32xf32>
    %33 = arith.subf %25, %32 : vector<15x32xf32>
    %34 = arith.mulf %33, %33 : vector<15x32xf32>
    %cst_16 = arith.constant dense<0.000000e+00> : vector<15xf32>
    %35 = vector.multi_reduction <add>, %34, %cst_16 [1] : vector<15x32xf32> to vector<15xf32>
    %36 = vector.shape_cast %35 : vector<15xf32> to vector<15x1xf32>
    %cst_17 = arith.constant 3.200000e+01 : f32
    %37 = vector.broadcast %cst_17 : f32 to vector<15x1xf32>
    %38 = arith.divf %36, %37 : vector<15x1xf32>
    %cst_18 = arith.constant 1.000000e-07 : f32
    %39 = vector.broadcast %cst_18 : f32 to vector<15x1xf32>
    %40 = arith.addf %38, %39 : vector<15x1xf32>
    %41 = math.rsqrt %40 : vector<15x1xf32>
    %42 = vector.broadcast %41 : vector<15x1xf32> to vector<15x32xf32>
    %43 = arith.mulf %33, %42 : vector<15x32xf32>
    %44 = vector.broadcast %26 : vector<1x32xf32> to vector<15x32xf32>
    %45 = arith.mulf %43, %44 : vector<15x32xf32>
    %46 = vector.broadcast %27 : vector<1x32xf32> to vector<15x32xf32>
    %47 = arith.addf %45, %46 : vector<15x32xf32>
    %c0_19 = arith.constant 0 : index
    %c0_20 = arith.constant 0 : index
    %48 = vector.load %arg4[%c0_19, %c0_20] : memref<15x32xf32, #tpu.memory_space<vmem>>, vector<15x32xf32>
    tpu.vector_store %arg4[%c0_19, %c0_20], %47 {strides = array<i32>} : memref<15x32xf32, #tpu.memory_space<vmem>>, vector<15x32xf32>,
    return
  }
}

</mosaic_0001>

<llo_original>
// kernel: embedding_forward.1
$region0: #{embedding_forward.1}
  #allocation0 [shape = 'u32[]', space=smem, size = 0x4, offset = 0x4, fixed_abs, tag = 'smem constant byte address 0x4 - core index']
  #allocation1 [shape = 'u32[144,128]{1,0:T(1,128)}', space=vmem, size = 0x12000, scoped, tag = 'internal scratch']
  %s0 = inlined_call_operand.vmem [shape: s32[32,1], index: 0, kind: input, shape index: {}]
  %s1 = inlined_call_operand.vmem [shape: f32[128,32], index: 1, kind: input, shape index: {}]
  %s2 = inlined_call_operand.vmem [shape: f32[17,32], index: 2, kind: input, shape index: {}]
  %s3 = inlined_call_operand.hbm [shape: f32[32,32], index: 3, kind: output, shape index: {0}]
  %s4 = inlined_call_operand.hbm [shape: f32[15,32], index: 4, kind: output, shape index: {1}]
  %5 = xla_tuple %s3, %s4
  %s6 = sld [smem:[#allocation0]]
  $region30: #{embedding_forward.1} parent=0
    _
  %s8 = ssub.s32 1, %s6
  %s9 = scalar_select 0, %s8, %s6
  $region1: #{embedding_forward.1} parent=0
    #allocation2 [shape = 'u8[16384]{0}', space=vmem, size = 0x4000, scoped, tag = 'output window, operand 0, single buffered']
    #allocation3 [shape = 's32[1]{0}', space=sflag, size = 0x4, scoped, tag = 'scoped memory for embedding_forward.1']
    #allocation4 [shape = 'u8[8192]{0}', space=vmem, size = 0x2000, scoped, tag = 'output window, operand 1, single buffered']
    #allocation5 [shape = 's32[1]{0}', space=sflag, size = 0x4, scoped, tag = 'scoped memory for embedding_forward.1']
    %10 = vsyncpa [#allocation3], 0
    %11 = vsyncpa [#allocation5], 0
    // Predicated region
    $region2: #{embedding_forward.1} parent=1 // pred_check
      _
    $region3: #{embedding_forward.1} parent=1 // pred_check_branch
      %13 = sbr.rel (0) target = $region5
    $region4: #{embedding_forward.1} parent=1 // pred_region
      _
    $region5: #{embedding_forward.1} parent=1 // pred_fallthru
      _
    // Predicated region
    $region6: #{embedding_forward.1} parent=1 // pred_check
      _
    $region7: #{embedding_forward.1} parent=1 // pred_check_branch
      %15 = sbr.rel (0) target = $region9
    $region8: #{embedding_forward.1} parent=1 // pred_region
      _
    $region9: #{embedding_forward.1} parent=1 // pred_fallthru
      _
    // Predicated region
    $region10: #{embedding_forward.1} parent=1 // pred_check
      _
    $region11: #{embedding_forward.1} parent=1 // pred_check_branch
      %17 = sbr.rel (0) target = $region13
    $region12: #{embedding_forward.1} parent=1 // pred_region
      _
    $region13: #{embedding_forward.1} parent=1 // pred_fallthru
      _
    %v18 = vld [vmem:[%s0] sm:$0xff]
    %v19 = vld [vmem:[%s0 + $0x8] sm:$0xff]
    %v20 = vld [vmem:[%s0 + $0x10] sm:$0xff]
    %v21 = vld [vmem:[%s0 + $0x18] sm:$0xff]
    %v22 = vlaneseq
    %v23 = vand.u32 %v22, 127
    %24 = vset.pattern.permute.xlu0 0
    %25 = vperm.xlu0 %24, %v18
    %v26 = vpop.permute.xlu0 %25
    %27 = vset.pattern.permute.xlu0 0
    %28 = vperm.xlu0 %27, %v19
    %v29 = vpop.permute.xlu0 %28
    %30 = vset.pattern.permute.xlu0 0
    %31 = vperm.xlu0 %30, %v20
    %v32 = vpop.permute.xlu0 %31
    %33 = vset.pattern.permute.xlu0 0
    %34 = vperm.xlu0 %33, %v21
    %v35 = vpop.permute.xlu0 %34
    %vm36 = vcmp.eq.s32.totalorder %v26, %v23
    %vm37 = vcmp.eq.s32.totalorder %v29, %v23
    %vm38 = vcmp.eq.s32.totalorder %v32, %v23
    %vm39 = vcmp.eq.s32.totalorder %v35, %v23
    %v40 = vsel %vm36, 1, 0
    %v41 = vsel %vm37, 1, 0
    %v42 = vsel %vm38, 1, 0
    %v43 = vsel %vm39, 1, 0
    %v44 = vcvt.s32.f32 %v40
    %v45 = vcvt.s32.f32 %v41
    %v46 = vcvt.s32.f32 %v42
    %v47 = vcvt.s32.f32 %v43
    %v48 = vld [vmem:[%s1] sm:$0xff]
    %v49 = vld [vmem:[%s1 + $0x8] sm:$0xff]
    %v50 = vld [vmem:[%s1 + $0x10] sm:$0xff]
    %v51 = vld [vmem:[%s1 + $0x18] sm:$0xff]
    %v52 = vld [vmem:[%s1 + $0x20] sm:$0xff]
    %v53 = vld [vmem:[%s1 + $0x28] sm:$0xff]
    %v54 = vld [vmem:[%s1 + $0x30] sm:$0xff]
    %v55 = vld [vmem:[%s1 + $0x38] sm:$0xff]
    %v56 = vld [vmem:[%s1 + $0x40] sm:$0xff]
    %v57 = vld [vmem:[%s1 + $0x48] sm:$0xff]
    %v58 = vld [vmem:[%s1 + $0x50] sm:$0xff]
    %v59 = vld [vmem:[%s1 + $0x58] sm:$0xff]
    %v60 = vld [vmem:[%s1 + $0x60] sm:$0xff]
    %v61 = vld [vmem:[%s1 + $0x68] sm:$0xff]
    %v62 = vld [vmem:[%s1 + $0x70] sm:$0xff]
    %v63 = vld [vmem:[%s1 + $0x78] sm:$0xff]
    %64 = vmatprep.subr.mxu0 0.0
    %65 = vmatpush1.msra.mxu0 %v63
    %66 = vmatprep.subr.mxu0 0.0
    %67 = vmatpush1.msra.mxu0 %v62
    %68 = vmatprep.subr.mxu0 0.0
    %69 = vmatpush1.msra.mxu0 %v61
    %70 = vmatprep.subr.mxu0 0.0
    %71 = vmatpush1.msra.mxu0 %v60
    %72 = vmatprep.subr.mxu0 0.0
    %73 = vmatpush1.msra.mxu0 %v59
    %74 = vmatprep.subr.mxu0 0.0
    %75 = vmatpush1.msra.mxu0 %v58
    %76 = vmatprep.subr.mxu0 0.0
    %77 = vmatpush1.msra.mxu0 %v57
    %78 = vmatprep.subr.mxu0 0.0
    %79 = vmatpush1.msra.mxu0 %v56
    %80 = vmatprep.subr.mxu0 0.0
    %81 = vmatpush1.msra.mxu0 %v55
    %82 = vmatprep.subr.mxu0 0.0
    %83 = vmatpush1.msra.mxu0 %v54
    %84 = vmatprep.subr.mxu0 0.0
    %85 = vmatpush1.msra.mxu0 %v53
    %86 = vmatprep.subr.mxu0 0.0
    %87 = vmatpush1.msra.mxu0 %v52
    %88 = vmatprep.subr.mxu0 0.0
    %89 = vmatpush1.msra.mxu0 %v51
    %90 = vmatprep.subr.mxu0 0.0
    %91 = vmatpush1.msra.mxu0 %v50
    %92 = vmatprep.subr.mxu0 0.0
    %93 = vmatpush1.msra.mxu0 %v49
    %94 = vmatprep.subr.mxu0 0.0
    %95 = vmatpush1.msra.mxu0 %v48
    %96 = vmatprep.subr.mxu0 0.0
    %97 = vmatpush2.msra.mxu0 0.0
    %98 = vmatprep.subr.mxu0 0.0
    %99 = vmatpush2.msra.mxu0 0.0
    %100 = vmatprep.subr.mxu0 0.0
    %101 = vmatpush2.msra.mxu0 0.0
    %102 = vmatprep.subr.mxu0 0.0
    %103 = vmatpush2.msra.mxu0 0.0
    %104 = vmatprep.subr.mxu0 0.0
    %105 = vmatpush2.msra.mxu0 0.0
    %106 = vmatprep.subr.mxu0 0.0
    %107 = vmatpush2.msra.mxu0 0.0
    %108 = vmatprep.subr.mxu0 0.0
    %109 = vmatpush2.msra.mxu0 0.0
    %110 = vmatprep.subr.mxu0 0.0
    %111 = vmatpush2.msra.mxu0 0.0
    %112 = vmatprep.subr.mxu0 0.0
    %113 = vmatpush2.msra.mxu0 0.0
    %114 = vmatprep.subr.mxu0 0.0
    %115 = vmatpush2.msra.mxu0 0.0
    %116 = vmatprep.subr.mxu0 0.0
    %117 = vmatpush2.msra.mxu0 0.0
    %118 = vmatprep.subr.mxu0 0.0
    %119 = vmatpush2.msra.mxu0 0.0
    %120 = vmatprep.subr.mxu0 0.0
    %121 = vmatpush2.msra.mxu0 0.0
    %122 = vmatprep.subr.mxu0 0.0
    %123 = vmatpush2.msra.mxu0 0.0
    %124 = vmatprep.subr.mxu0 0.0
    %125 = vmatpush2.msra.mxu0 0.0
    %126 = vmatprep.subr.mxu0 0.0
    %127 = vmatpush2.msra.mxu0 0.0
    %128 = vmatprep.mubr.f32.mxu0 0.0
    %129 = vmatmul.mubr.f32.gmra.mxu0 %v44
    %v130 = vpop.f32.mrf.mxu0
    %v131 = vadd.f32 0.0, %v130
    %v132 = vpop.f32.mrf.mxu0
    %133 = vmatprep.mubr.f32.mxu0 0.0
    %134 = vmatmul.mubr.f32.gmra.mxu0 %v45
    %v135 = vpop.f32.mrf.mxu0
    %v136 = vadd.f32 0.0, %v135
    %v137 = vpop.f32.mrf.mxu0
    %138 = vmatprep.mubr.f32.mxu0 0.0
    %139 = vmatmul.mubr.f32.gmra.mxu0 %v46
    %v140 = vpop.f32.mrf.mxu0
    %v141 = vadd.f32 0.0, %v140
    %v142 = vpop.f32.mrf.mxu0
    %143 = vmatprep.mubr.f32.mxu0 0.0
    %144 = vmatmul.mubr.f32.gmra.mxu0 %v47
    %v145 = vpop.f32.mrf.mxu0
    %v146 = vadd.f32 0.0, %v145
    %v147 = vpop.f32.mrf.mxu0
    %148 = vdwg.mxu0
    %vm149 = vcmask 261120
    %v150 = vsel %vm149, %v131, 0.0
    %151 = vadd.xlane.f32.xlu0 %v150
    %v152 = vpop.xlane.xlu0 %151
    %v153 = vsel %vm149, %v136, 0.0
    %154 = vadd.xlane.f32.xlu0 %v153
    %v155 = vpop.xlane.xlu0 %154
    %v156 = vsel %vm149, %v141, 0.0
    %157 = vadd.xlane.f32.xlu0 %v156
    %v158 = vpop.xlane.xlu0 %157
    %v159 = vsel %vm149, %v146, 0.0
    %160 = vadd.xlane.f32.xlu0 %v159
    %v161 = vpop.xlane.xlu0 %160
    %v162 = vrcp.pop 32.0
    %v163 = vmul.f32 %v152, %v162
    %v164 = vmul.f32 %v155, %v162
    %v165 = vmul.f32 %v158, %v162
    %v166 = vmul.f32 %v161, %v162
    %v167 = vsub.f32 %v131, %v163
    %v168 = vsub.f32 %v136, %v164
    %v169 = vsub.f32 %v141, %v165
    %v170 = vsub.f32 %v146, %v166
    %v171 = vmul.f32 %v167, %v167
    %v172 = vmul.f32 %v168, %v168
    %v173 = vmul.f32 %v169, %v169
    %v174 = vmul.f32 %v170, %v170
    %v175 = vsel %vm149, %v171, 0.0
    %176 = vadd.xlane.f32.xlu0 %v175
    %v177 = vpop.xlane.xlu0 %176
    %v178 = vsel %vm149, %v172, 0.0
    %179 = vadd.xlane.f32.xlu0 %v178
    %v180 = vpop.xlane.xlu0 %179
    %v181 = vsel %vm149, %v173, 0.0
    %182 = vadd.xlane.f32.xlu0 %v181
    %v183 = vpop.xlane.xlu0 %182
    %v184 = vsel %vm149, %v174, 0.0
    %185 = vadd.xlane.f32.xlu0 %v184
    %v186 = vpop.xlane.xlu0 %185
    %v187 = vmul.f32 %v177, %v162
    %v188 = vmul.f32 %v180, %v162
    %v189 = vmul.f32 %v183, %v162
    %v190 = vmul.f32 %v186, %v162
    %v191 = vadd.f32 %v187, 1e-07
    %v192 = vadd.f32 %v188, 1e-07
    %v193 = vadd.f32 %v189, 1e-07
    %v194 = vadd.f32 %v190, 1e-07
    %v195 = vrsqrt.pop %v191
    %v196 = vrsqrt.pop %v192
    %v197 = vrsqrt.pop %v193
    %v198 = vrsqrt.pop %v194
    %v199 = vmul.f32 %v167, %v195
    %v200 = vmul.f32 %v168, %v196
    %v201 = vmul.f32 %v169, %v197
    %v202 = vmul.f32 %v170, %v198
    %203 = vst.msk [vmem:[#allocation2] sm:$0xff] %vm149, %v199
    %204 = vst.msk [vmem:[#allocation2 + $0x8] sm:$0xff] %vm149, %v200
    %205 = vst.msk [vmem:[#allocation2 + $0x10] sm:$0xff] %vm149, %v201
    %206 = vst.msk [vmem:[#allocation2 + $0x18] sm:$0xff] %vm149, %v202
    %v207 = vld [vmem:[%s2] sm:$0xff]
    %v208 = vld [vmem:[%s2 + $0x8] sm:$0x7f]
    %v209 = vld [vmem:[%s2 + $0xf] sm:$0x1]
    %v210 = vld [vmem:[%s2 + $0x10] sm:$0x1]
    %v211 = vsel %vm149, %v207, 0.0
    %212 = vadd.xlane.f32.xlu0 %v211
    %v213 = vpop.xlane.xlu0 %212
    %vm214 = vcmask 260096
    %v215 = vsel %vm214, %v208, 0.0
    %216 = vadd.xlane.f32.xlu0 %v215
    %v217 = vpop.xlane.xlu0 %216
    %v218 = vmul.f32 %v213, %v162
    %v219 = vmul.f32 %v217, %v162
    %v220 = vsub.f32 %v207, %v218
    %v221 = vsub.f32 %v208, %v219
    %v222 = vmul.f32 %v220, %v220
    %v223 = vmul.f32 %v221, %v221
    %v224 = vsel %vm149, %v222, 0.0
    %225 = vadd.xlane.f32.xlu0 %v224
    %v226 = vpop.xlane.xlu0 %225
    %v227 = vsel %vm214, %v223, 0.0
    %228 = vadd.xlane.f32.xlu0 %v227
    %v229 = vpop.xlane.xlu0 %228
    %v230 = vmul.f32 %v226, %v162
    %v231 = vmul.f32 %v229, %v162
    %v232 = vadd.f32 %v230, 1e-07
    %v233 = vadd.f32 %v231, 1e-07
    %v234 = vrsqrt.pop %v232
    %v235 = vrsqrt.pop %v233
    %v236 = vmul.f32 %v220, %v234
    %v237 = vmul.f32 %v221, %v235
    %v238 = vlaneseq
    %v239 = vshrl.u32 %v238, 7
    %v240 = vsub.s32 0, %v239
    %v241 = vrot.slane %v209, %v240
    %v242 = vmul.f32 %v236, %v241
    %v243 = vmul.f32 %v237, %v241
    %v244 = vlaneseq
    %v245 = vshrl.u32 %v244, 7
    %v246 = vsub.s32 0, %v245
    %v247 = vrot.slane %v210, %v246
    %v248 = vadd.f32 %v242, %v247
    %v249 = vadd.f32 %v243, %v247
    %250 = vst.msk [vmem:[#allocation4] sm:$0xff] %vm149, %v248
    %251 = vst.msk [vmem:[#allocation4 + $0x8] sm:$0x7f] %vm214, %v249
    // Predicated region
    $region14: #{embedding_forward.1} parent=1 // pred_check
      _
    $region15: #{embedding_forward.1} parent=1 // pred_check_branch
      %253 = sbr.rel (0) target = $region17
    $region16: #{embedding_forward.1} parent=1 // pred_region
      %s255 = ssub.s32 512, 512
      %256 = vsyncadd [#allocation3], %s255
      %s257 = sshll.u32 [#allocation2], 4
      %s258 = int_to_ptr.vmem [resolvable:$true] %s257
      %263 = dma.vmem_to_hbm [thread:$0]  %s258, 512, %s3, [#allocation3], 128, 128, 8
    $region17: #{embedding_forward.1} parent=1 // pred_fallthru
      _
    // Predicated region
    $region18: #{embedding_forward.1} parent=1 // pred_check
      _
    $region19: #{embedding_forward.1} parent=1 // pred_check_branch
      %265 = sbr.rel (0) target = $region21
    $region20: #{embedding_forward.1} parent=1 // pred_region
      %s267 = ssub.s32 256, 256
      %268 = vsyncadd [#allocation5], %s267
      %s269 = sshll.u32 [#allocation4], 4
      %s270 = int_to_ptr.vmem [resolvable:$true] %s269
      %275 = dma.vmem_to_hbm [thread:$0]  %s270, 256, %s4, [#allocation5], 128, 128, 8
    $region21: #{embedding_forward.1} parent=1 // pred_fallthru
      _
    // Predicated region
    $region22: #{embedding_forward.1} parent=1 // pred_check
      _
    $region23: #{embedding_forward.1} parent=1 // pred_check_branch
      %277 = sbr.rel (0) target = $region25
    $region24: #{embedding_forward.1} parent=1 // pred_region
      %278 = dma.done [#allocation3], 512
    $region25: #{embedding_forward.1} parent=1 // pred_fallthru
      _
    // Predicated region
    $region26: #{embedding_forward.1} parent=1 // pred_check
      _
    $region27: #{embedding_forward.1} parent=1 // pred_check_branch
      %280 = sbr.rel (0) target = $region29
    $region28: #{embedding_forward.1} parent=1 // pred_region
      %281 = dma.done [#allocation5], 256
    $region29: #{embedding_forward.1} parent=1 // pred_fallthru
      _
    %282 = vsyncpa [#allocation3], 1
    %283 = vsyncpa [#allocation5], 1

</llo_original>
